<compile_context>
chip_gen: v5e
topology: v5e:2x2
jax: 0.10.0
libtpu: 0.0.40
codegen_flags: <defaults>
</compile_context>

<pallas_src>
import functools
import math

import jax
import jax.numpy as jnp
from jax.experimental import pallas as pl
from jax.experimental.pallas import tpu as pltpu

NEG_BIAS = 1e9          # additive off-edge bias magnitude (bf16-representable)
LEAKY_ALPHA = 0.2       # GraphAttConvOneHead default
_MB = 1024 * 1024


def gat_rowtile_kernel(mask_ref, al_ref, ar_ref, h_ref, out_ref, *, heads, fp,
                       elem_dtype, spmm_dtype):
    """One query-row tile: masked softmax over all N keys + per-head spmm.

    mask_ref: (TQ, N)        int8 adjacency (1 on edge, 0 off edge) - streamed
    al_ref:   (TQ, heads)    f32  a_src . h_i for the tile's query rows
    ar_ref:   (heads, N)     f32  a_dst . h_j for all key rows (resident)
    h_ref:    (heads, N, Fp) f32  projected features (resident)
    out_ref:  (TQ, heads*Fp)      concatenated per-head outputs
    """
    # Additive mask bias formed in-kernel: 0 on edges, -1e9 off edges.
    mask = mask_ref[...].astype(elem_dtype)                          # (TQ, N)
    bias = mask * NEG_BIAS - NEG_BIAS
    al = al_ref[...].astype(elem_dtype)                              # (TQ, heads)
    ar = ar_ref[...].astype(elem_dtype)                              # (heads, N)

    outs = []
    for hh in range(heads):                        # heads is small & static: unrolled
        # e_ij = leakyrelu(a_src.h_i + a_dst.h_j); off-edge entries pushed to -1e9.
        e = al[:, hh:hh + 1] + ar[hh:hh + 1, :]                      # (TQ, N)
        e = jnp.maximum(e, LEAKY_ALPHA * e)                          # LeakyReLU(0.2)
        e = e + bias                                                 # additive mask
        row_max = jnp.max(e, axis=1, keepdims=True)                  # scatter_max
        p = jnp.exp(e - row_max)                                     # off-edge -> 0
        denom = jnp.sum(p.astype(jnp.float32), axis=1,               # scatter_add
                        keepdims=True) + 1e-16                       # (f32 accum)

        # TODO(synk): dropout on attention coefficients omitted (identity in eval).

        # spmm on the MXU (bf16 inputs, f32 accumulate); softmax divide deferred
        # to after the matmul (N*Fp scale + EUP reciprocal instead of N^2 divides).
        # NOTE: with Fp < 128 the matmul uses a fraction of the MXU output
        # columns; for production pick Fp (or pack heads) so the RHS is >=128 wide.
        h_h = h_ref[hh].astype(spmm_dtype)                           # (N, Fp) view
        acc = jnp.dot(p.astype(spmm_dtype), h_h,
                      preferred_element_type=jnp.float32)            # (TQ, Fp)
        outs.append(acc * pl.reciprocal(denom, approx=True))

    # Single lane-dense store of the concatenated heads.
    out_ref[...] = jnp.concatenate(outs, axis=1).astype(out_ref.dtype)


def _chip_config():
    """Per-generation (tq budget, scoped vmem limit, bf16 VPU/EUP available)."""
    kind = ""
    try:
        kind = jax.devices()[0].device_kind.lower()
    except Exception:
        pass
    if "v7" in kind or "7x" in kind:
        return 40 * _MB, 48 * _MB, True          # 64 MiB VMEM per TensorCore
    if any(v in kind for v in ("v2", "v3", "v4", "v5")):
        return 80 * _MB, 96 * _MB, False         # 128 MiB VMEM, no bf16 VPU/EUP
    if "v6" in kind:
        return 80 * _MB, 96 * _MB, True          # 128 MiB VMEM, bf16 VALU/EUP
    return 40 * _MB, 48 * _MB, True              # unknown: conservative VMEM


def _choose_tq(n, heads, fp, elem_bytes, budget_bytes):
    """Largest row tile TQ (multiple of 32, dividing N, <=512) fitting VMEM."""
    lane = 128
    fp_pad = -(-fp // lane) * lane               # f32 lane padding of (N, Fp) slabs
    hf_pad = -(-(heads * fp) // lane) * lane
    n_pad = -(-n // lane) * lane
    # Residents are double-buffered by the default pipeline even though their
    # block index never changes (pl.Buffered(1) would halve this; see TODO above).
    resident = 2 * (heads * n * fp_pad * 4       # h (heads, N, Fp), lane-padded
                    + 8 * n_pad * 4)             # ar (heads, N), sublane-padded
    per_row = (2 * n_pad * 1                     # int8 mask tile x2 (double-buffered)
               + 3 * n_pad * elem_bytes          # e / p temporaries
               + 2 * hf_pad * 4                  # f32 output tile x2
               + 2 * lane * 4)                   # al tile x2
    tq = (budget_bytes - resident) // max(per_row, 1)
    tq = int(min(n, 512, max(tq, 32)))
    tq = max(32, (tq // 32) * 32)                # int8 mask packs 32 rows/sublane-group
    while tq > 32 and n % tq:
        tq -= 32
    if n % tq:
        tq = n                                   # fall back to one full-height tile
    return tq


def graph_att_conv(x, adj_mask, W, a, *, tq=None, spmm_dtype=jnp.bfloat16,
                   elem_dtype=None):
    """x: (N, Fin), adj_mask: (N, N) 0/1, W: (heads, Fin, Fp), a: (heads, 1, 2*Fp).

    Returns (N, heads*Fp), matching torch.cat([head_h(x, adj) ...], dim=1).
    """
    N, Fin = x.shape
    heads, _, Fp = W.shape
    HF = heads * Fp

    budget, vmem_limit, bf16_ok = _chip_config()
    if elem_dtype is None:
        elem_dtype = jnp.bfloat16 if bf16_ok else jnp.float32

    # --- Hoisted projection: one wide matmul instead of `heads` tiny ones. ---
    W_all = jnp.transpose(W, (1, 0, 2)).reshape(Fin, HF)       # (Fin, heads*Fp)
    h = (x @ W_all).astype(jnp.float32)                        # (N, heads*Fp)
    h_heads = h.reshape(N, heads, Fp)

    # --- Hoisted per-head logit halves (O(N*heads) data). ---
    a_src = a[:, 0, :Fp]                                       # (heads, Fp)
    a_dst = a[:, 0, Fp:]                                       # (heads, Fp)
    al = jnp.einsum("nhf,hf->nh", h_heads, a_src)              # (N, heads)
    ar = jnp.einsum("nhf,hf->hn", h_heads, a_dst)              # (heads, N)

    # h in (heads, N, Fp) layout so the kernel indexes the leading axis only
    # (no sub-128 lane slicing / per-head relayout copies inside the kernel).
    h_hnf = jnp.transpose(h_heads, (1, 0, 2)).astype(jnp.float32)

    # --- int8 edge mask: the dominant N^2 HBM stream at 1 byte/element. ---
    mask_i8 = (adj_mask > 0).astype(jnp.int8)                  # (N, N)

    if tq is None:
        tq = _choose_tq(N, heads, Fp, jnp.dtype(elem_dtype).itemsize, budget)
    assert N % tq == 0

    kernel = functools.partial(gat_rowtile_kernel, heads=heads, fp=Fp,
                               elem_dtype=elem_dtype, spmm_dtype=spmm_dtype)

    out = pl.pallas_call(
        kernel,
        out_shape=jax.ShapeDtypeStruct((N, HF), jnp.float32),
        grid=(N // tq,),
        in_specs=[
            pl.BlockSpec((tq, N), lambda r: (r, 0)),            # int8 mask (streamed)
            pl.BlockSpec((tq, heads), lambda r: (r, 0)),        # al tile
            pl.BlockSpec((heads, N), lambda r: (0, 0)),         # ar (resident)
            pl.BlockSpec((heads, N, Fp), lambda r: (0, 0, 0)),  # h  (resident)
        ],
        out_specs=pl.BlockSpec((tq, HF), lambda r: (r, 0)),     # concatenated layout
        compiler_params=pltpu.CompilerParams(
            dimension_semantics=("parallel",),
            vmem_limit_bytes=vmem_limit,
        ),
    )(mask_i8, al, ar, h_hnf)
    return out


def reference(x, adj_mask, W, a):
    """Pure-JAX f32 reference of the same dense-mask formulation (torch semantics)."""
    outs = []
    for hh in range(W.shape[0]):
        h = x @ W[hh]
        fp = h.shape[1]
        al = h @ a[hh, 0, :fp]
        ar = h @ a[hh, 0, fp:]
        e = al[:, None] + ar[None, :]
        e = jnp.where(e > 0, e, LEAKY_ALPHA * e)
        edge = adj_mask > 0
        em = jnp.where(edge, e, -1e30)
        rm = em.max(axis=1, keepdims=True)
        p = jnp.where(edge, jnp.exp(e - rm), 0.0)
        alpha = p / (p.sum(axis=1, keepdims=True) + 1e-16)
        outs.append(alpha @ h)
    return jnp.concatenate(outs, axis=1)


if __name__ == "__main__":
    key = jax.random.PRNGKey(0)
    N, Fin, heads, out_features = 128, 16, 4, 32
    assert out_features % heads == 0
    Fp = out_features // heads

    k_x, k_w, k_a, k_e = jax.random.split(key, 4)

    # Node features
    x = jax.random.normal(k_x, (N, Fin), dtype=jnp.float32)

    # Deterministic xavier_normal_ init with gain = calculate_gain('relu') = sqrt(2)
    gain = math.sqrt(2.0)
    w_std = gain * math.sqrt(2.0 / (Fin + Fp))            # weight: (Fin, Fp) per head
    a_std = gain * math.sqrt(2.0 / (1 + 2 * Fp))          # a: (1, 2*Fp) per head
    W = (w_std * jax.random.normal(k_w, (heads, Fin, Fp))).astype(jnp.float32)
    a = (a_std * jax.random.normal(k_a, (heads, 1, 2 * Fp))).astype(jnp.float32)

    # Sparse adjacency as a dense 0/1 mask (random edges + self loops)
    rand_edges = (jax.random.uniform(k_e, (N, N)) < 0.15).astype(jnp.float32)
    adj_mask = jnp.maximum(rand_edges, jnp.eye(N, dtype=jnp.float32))

    # tq=32 exercises the row-tile pipeline (grid of 4) with int8-friendly rows.
    out = graph_att_conv(x, adj_mask, W, a, tq=32)
    out = jax.block_until_ready(out)

    ref = reference(x, adj_mask, W, a)
    assert out.shape == (N, heads * Fp)
    # bf16 spmm / bf16 e-p pipeline / approx reciprocal => f32-tight 1e-4 is not
    # expected; 5e-2 comfortably bounds the bf16 rounding on this workload.
    assert jnp.allclose(out, ref, atol=5e-2, rtol=5e-2), float(jnp.abs(out - ref).max())

    print("KERNEL_OK")
</pallas_src>

<mosaic_0001>
module attributes {stable_mosaic.version = 11 : i64} {
  func.func @gat_rowtile_kernel(%arg0: i32, %arg1: memref<32x128xi8, #tpu.memory_space<vmem>>, %arg2: memref<32x4xf32, #tpu.memory_space<vmem>>, %arg3: memref<4x128xf32, #tpu.memory_space<vmem>>, %arg4: memref<4x128x8xf32, #tpu.memory_space<vmem>>, %arg5: memref<32x32xf32, #tpu.memory_space<vmem>>) attributes {dimension_semantics = [#tpu.dimension_semantics<parallel>], iteration_bounds = array<i64: 4>, scalar_prefetch = 0 : i64, scratch_operands = 0 : i64, tpu.core_type = #tpu.core_type<tc>, window_params = [{transform_indices = @transform_0, window_bounds = array<i64: 32, 128>}, {transform_indices = @transform_1, window_bounds = array<i64: 32, 4>}, {pipeline_mode = #tpu.pipeline_mode<synchronous>, transform_indices = @transform_2, window_bounds = array<i64: 4, 128>}, {pipeline_mode = #tpu.pipeline_mode<synchronous>, transform_indices = @transform_3, window_bounds = array<i64: 4, 128, 8>}, {transform_indices = @transform_4, window_bounds = array<i64: 32, 32>}]} {
    %c0 = arith.constant 0 : index
    %c0_0 = arith.constant 0 : index
    %0 = vector.load %arg1[%c0, %c0_0] : memref<32x128xi8, #tpu.memory_space<vmem>>, vector<32x128xi8>
    %1 = arith.sitofp %0 : vector<32x128xi8> to vector<32x128xbf16>
    %cst = arith.constant 9.982440e+08 : bf16
    %2 = vector.broadcast %cst : bf16 to vector<32x128xbf16>
    %3 = arith.mulf %1, %2 : vector<32x128xbf16>
    %cst_1 = arith.constant 9.982440e+08 : bf16
    %4 = vector.broadcast %cst_1 : bf16 to vector<32x128xbf16>
    %5 = arith.subf %3, %4 : vector<32x128xbf16>
    %c0_2 = arith.constant 0 : index
    %c0_3 = arith.constant 0 : index
    %6 = vector.load %arg2[%c0_2, %c0_3] : memref<32x4xf32, #tpu.memory_space<vmem>>, vector<32x4xf32>
    %7 = arith.truncf %6 : vector<32x4xf32> to vector<32x4xbf16>
    %c0_4 = arith.constant 0 : index
    %c0_5 = arith.constant 0 : index
    %8 = vector.load %arg3[%c0_4, %c0_5] : memref<4x128xf32, #tpu.memory_space<vmem>>, vector<4x128xf32>
    %9 = arith.truncf %8 : vector<4x128xf32> to vector<4x128xbf16>
    %10 = vector.extract_strided_slice %7 {offsets = [0, 0], sizes = [32, 1], strides = [1, 1]} : vector<32x4xbf16> to vector<32x1xbf16>
    %11 = vector.extract_strided_slice %9 {offsets = [0, 0], sizes = [1, 128], strides = [1, 1]} : vector<4x128xbf16> to vector<1x128xbf16>
    %12 = vector.broadcast %10 : vector<32x1xbf16> to vector<32x128xbf16>
    %13 = vector.broadcast %11 : vector<1x128xbf16> to vector<32x128xbf16>
    %14 = arith.addf %12, %13 : vector<32x128xbf16>
    %cst_6 = arith.constant 2.001950e-01 : bf16
    %15 = vector.broadcast %cst_6 : bf16 to vector<32x128xbf16>
    %16 = arith.mulf %15, %14 : vector<32x128xbf16>
    %17 = arith.maximumf %14, %16 : vector<32x128xbf16>
    %18 = arith.addf %17, %5 : vector<32x128xbf16>
    %cst_7 = arith.constant dense<0xFF80> : vector<32xbf16>
    %19 = vector.multi_reduction <maximumf>, %18, %cst_7 [1] : vector<32x128xbf16> to vector<32xbf16>
    %20 = vector.shape_cast %19 : vector<32xbf16> to vector<32x1xbf16>
    %21 = vector.broadcast %20 : vector<32x1xbf16> to vector<32x128xbf16>
    %22 = arith.subf %18, %21 : vector<32x128xbf16>
    %23 = math.exp %22 : vector<32x128xbf16>
    %24 = arith.extf %23 : vector<32x128xbf16> to vector<32x128xf32>
    %cst_8 = arith.constant dense<0.000000e+00> : vector<32xf32>
    %25 = vector.multi_reduction <add>, %24, %cst_8 [1] : vector<32x128xf32> to vector<32xf32>
    %26 = vector.shape_cast %25 : vector<32xf32> to vector<32x1xf32>
    %cst_9 = arith.constant 1.000000e-16 : f32
    %27 = vector.broadcast %cst_9 : f32 to vector<32x1xf32>
    %28 = arith.addf %26, %27 : vector<32x1xf32>
    %c0_10 = arith.constant 0 : index
    %c0_11 = arith.constant 0 : index
    %c0_12 = arith.constant 0 : index
    %29 = vector.load %arg4[%c0_10, %c0_11, %c0_12] : memref<4x128x8xf32, #tpu.memory_space<vmem>>, vector<1x128x8xf32>
    %30 = vector.shape_cast %29 : vector<1x128x8xf32> to vector<128x8xf32>
    %31 = arith.truncf %30 : vector<128x8xf32> to vector<128x8xbf16>
    %cst_13 = arith.constant dense<0.000000e+00> : vector<32x8xf32>
    %32 = tpu.matmul %23, %31, %cst_13 {dimension_numbers = #tpu.dot_dimension_numbers<[1], [0], [0], [1], [0, 0, 1, 1], [], []>} : vector<32x128xbf16>, vector<128x8xbf16>, vector<32x8xf32> -> vector<32x8xf32>
    %33 = tpu.reciprocal %28 {approx = true} : vector<32x1xf32> -> vector<32x1xf32>
    %34 = vector.broadcast %33 : vector<32x1xf32> to vector<32x8xf32>
    %35 = arith.mulf %32, %34 : vector<32x8xf32>
    %36 = vector.extract_strided_slice %7 {offsets = [0, 1], sizes = [32, 1], strides = [1, 1]} : vector<32x4xbf16> to vector<32x1xbf16>
    %37 = vector.extract_strided_slice %9 {offsets = [1, 0], sizes = [1, 128], strides = [1, 1]} : vector<4x128xbf16> to vector<1x128xbf16>
    %38 = vector.broadcast %36 : vector<32x1xbf16> to vector<32x128xbf16>
    %39 = vector.broadcast %37 : vector<1x128xbf16> to vector<32x128xbf16>
    %40 = arith.addf %38, %39 : vector<32x128xbf16>
    %cst_14 = arith.constant 2.001950e-01 : bf16
    %41 = vector.broadcast %cst_14 : bf16 to vector<32x128xbf16>
    %42 = arith.mulf %41, %40 : vector<32x128xbf16>
    %43 = arith.maximumf %40, %42 : vector<32x128xbf16>
    %44 = arith.addf %43, %5 : vector<32x128xbf16>
    %cst_15 = arith.constant dense<0xFF80> : vector<32xbf16>
    %45 = vector.multi_reduction <maximumf>, %44, %cst_15 [1] : vector<32x128xbf16> to vector<32xbf16>
    %46 = vector.shape_cast %45 : vector<32xbf16> to vector<32x1xbf16>
    %47 = vector.broadcast %46 : vector<32x1xbf16> to vector<32x128xbf16>
    %48 = arith.subf %44, %47 : vector<32x128xbf16>
    %49 = math.exp %48 : vector<32x128xbf16>
    %50 = arith.extf %49 : vector<32x128xbf16> to vector<32x128xf32>
    %cst_16 = arith.constant dense<0.000000e+00> : vector<32xf32>
    %51 = vector.multi_reduction <add>, %50, %cst_16 [1] : vector<32x128xf32> to vector<32xf32>
    %52 = vector.shape_cast %51 : vector<32xf32> to vector<32x1xf32>
    %cst_17 = arith.constant 1.000000e-16 : f32
    %53 = vector.broadcast %cst_17 : f32 to vector<32x1xf32>
    %54 = arith.addf %52, %53 : vector<32x1xf32>
    %c1 = arith.constant 1 : index
    %c0_18 = arith.constant 0 : index
    %c0_19 = arith.constant 0 : index
    %55 = vector.load %arg4[%c1, %c0_18, %c0_19] : memref<4x128x8xf32, #tpu.memory_space<vmem>>, vector<1x128x8xf32>
    %56 = vector.shape_cast %55 : vector<1x128x8xf32> to vector<128x8xf32>
    %57 = arith.truncf %56 : vector<128x8xf32> to vector<128x8xbf16>
    %cst_20 = arith.constant dense<0.000000e+00> : vector<32x8xf32>
    %58 = tpu.matmul %49, %57, %cst_20 {dimension_numbers = #tpu.dot_dimension_numbers<[1], [0], [0], [1], [0, 0, 1, 1], [], []>} : vector<32x128xbf16>, vector<128x8xbf16>, vector<32x8xf32> -> vector<32x8xf32>
    %59 = tpu.reciprocal %54 {approx = true} : vector<32x1xf32> -> vector<32x1xf32>
    %60 = vector.broadcast %59 : vector<32x1xf32> to vector<32x8xf32>
    %61 = arith.mulf %58, %60 : vector<32x8xf32>
    %62 = vector.extract_strided_slice %7 {offsets = [0, 2], sizes = [32, 1], strides = [1, 1]} : vector<32x4xbf16> to vector<32x1xbf16>
    %63 = vector.extract_strided_slice %9 {offsets = [2, 0], sizes = [1, 128], strides = [1, 1]} : vector<4x128xbf16> to vector<1x128xbf16>
    %64 = vector.broadcast %62 : vector<32x1xbf16> to vector<32x128xbf16>
    %65 = vector.broadcast %63 : vector<1x128xbf16> to vector<32x128xbf16>
    %66 = arith.addf %64, %65 : vector<32x128xbf16>
    %cst_21 = arith.constant 2.001950e-01 : bf16
    %67 = vector.broadcast %cst_21 : bf16 to vector<32x128xbf16>
    %68 = arith.mulf %67, %66 : vector<32x128xbf16>
    %69 = arith.maximumf %66, %68 : vector<32x128xbf16>
    %70 = arith.addf %69, %5 : vector<32x128xbf16>
    %cst_22 = arith.constant dense<0xFF80> : vector<32xbf16>
    %71 = vector.multi_reduction <maximumf>, %70, %cst_22 [1] : vector<32x128xbf16> to vector<32xbf16>
    %72 = vector.shape_cast %71 : vector<32xbf16> to vector<32x1xbf16>
    %73 = vector.broadcast %72 : vector<32x1xbf16> to vector<32x128xbf16>
    %74 = arith.subf %70, %73 : vector<32x128xbf16>
    %75 = math.exp %74 : vector<32x128xbf16>
    %76 = arith.extf %75 : vector<32x128xbf16> to vector<32x128xf32>
    %cst_23 = arith.constant dense<0.000000e+00> : vector<32xf32>
    %77 = vector.multi_reduction <add>, %76, %cst_23 [1] : vector<32x128xf32> to vector<32xf32>
    %78 = vector.shape_cast %77 : vector<32xf32> to vector<32x1xf32>
    %cst_24 = arith.constant 1.000000e-16 : f32
    %79 = vector.broadcast %cst_24 : f32 to vector<32x1xf32>
    %80 = arith.addf %78, %79 : vector<32x1xf32>
    %c2 = arith.constant 2 : index
    %c0_25 = arith.constant 0 : index
    %c0_26 = arith.constant 0 : index
    %81 = vector.load %arg4[%c2, %c0_25, %c0_26] : memref<4x128x8xf32, #tpu.memory_space<vmem>>, vector<1x128x8xf32>
    %82 = vector.shape_cast %81 : vector<1x128x8xf32> to vector<128x8xf32>
    %83 = arith.truncf %82 : vector<128x8xf32> to vector<128x8xbf16>
    %cst_27 = arith.constant dense<0.000000e+00> : vector<32x8xf32>
    %84 = tpu.matmul %75, %83, %cst_27 {dimension_numbers = #tpu.dot_dimension_numbers<[1], [0], [0], [1], [0, 0, 1, 1], [], []>} : vector<32x128xbf16>, vector<128x8xbf16>, vector<32x8xf32> -> vector<32x8xf32>
    %85 = tpu.reciprocal %80 {approx = true} : vector<32x1xf32> -> vector<32x1xf32>
    %86 = vector.broadcast %85 : vector<32x1xf32> to vector<32x8xf32>
    %87 = arith.mulf %84, %86 : vector<32x8xf32>
    %88 = vector.extract_strided_slice %7 {offsets = [0, 3], sizes = [32, 1], strides = [1, 1]} : vector<32x4xbf16> to vector<32x1xbf16>
    %89 = vector.extract_strided_slice %9 {offsets = [3, 0], sizes = [1, 128], strides = [1, 1]} : vector<4x128xbf16> to vector<1x128xbf16>
    %90 = vector.broadcast %88 : vector<32x1xbf16> to vector<32x128xbf16>
    %91 = vector.broadcast %89 : vector<1x128xbf16> to vector<32x128xbf16>
    %92 = arith.addf %90, %91 : vector<32x128xbf16>
    %cst_28 = arith.constant 2.001950e-01 : bf16
    %93 = vector.broadcast %cst_28 : bf16 to vector<32x128xbf16>
    %94 = arith.mulf %93, %92 : vector<32x128xbf16>
    %95 = arith.maximumf %92, %94 : vector<32x128xbf16>
    %96 = arith.addf %95, %5 : vector<32x128xbf16>
    %cst_29 = arith.constant dense<0xFF80> : vector<32xbf16>
    %97 = vector.multi_reduction <maximumf>, %96, %cst_29 [1] : vector<32x128xbf16> to vector<32xbf16>
    %98 = vector.shape_cast %97 : vector<32xbf16> to vector<32x1xbf16>
    %99 = vector.broadcast %98 : vector<32x1xbf16> to vector<32x128xbf16>
    %100 = arith.subf %96, %99 : vector<32x128xbf16>
    %101 = math.exp %100 : vector<32x128xbf16>
    %102 = arith.extf %101 : vector<32x128xbf16> to vector<32x128xf32>
    %cst_30 = arith.constant dense<0.000000e+00> : vector<32xf32>
    %103 = vector.multi_reduction <add>, %102, %cst_30 [1] : vector<32x128xf32> to vector<32xf32>
    %104 = vector.shape_cast %103 : vector<32xf32> to vector<32x1xf32>
    %cst_31 = arith.constant 1.000000e-16 : f32
    %105 = vector.broadcast %cst_31 : f32 to vector<32x1xf32>
    %106 = arith.addf %104, %105 : vector<32x1xf32>
    %c3 = arith.constant 3 : index
    %c0_32 = arith.constant 0 : index
    %c0_33 = arith.constant 0 : index
    %107 = vector.load %arg4[%c3, %c0_32, %c0_33] : memref<4x128x8xf32, #tpu.memory_space<vmem>>, vector<1x128x8xf32>
    %108 = vector.shape_cast %107 : vector<1x128x8xf32> to vector<128x8xf32>
    %109 = arith.truncf %108 : vector<128x8xf32> to vector<128x8xbf16>
    %cst_34 = arith.constant dense<0.000000e+00> : vector<32x8xf32>
    %110 = tpu.matmul %101, %109, %cst_34 {dimension_numbers = #tpu.dot_dimension_numbers<[1], [0], [0], [1], [0, 0, 1, 1], [], []>} : vector<32x128xbf16>, vector<128x8xbf16>, vector<32x8xf32> -> vector<32x8xf32>
    %111 = tpu.reciprocal %106 {approx = true} : vector<32x1xf32> -> vector<32x1xf32>
    %112 = vector.broadcast %111 : vector<32x1xf32> to vector<32x8xf32>
    %113 = arith.mulf %110, %112 : vector<32x8xf32>
    %114 = tpu.concatenate %35, %61, %87, %113 in 1 : vector<32x8xf32>, vector<32x8xf32>, vector<32x8xf32>, vector<32x8xf32> -> vector<32x32xf32>
    %c0_35 = arith.constant 0 : index
    %c0_36 = arith.constant 0 : index
    %115 = vector.load %arg5[%c0_35, %c0_36] : memref<32x32xf32, #tpu.memory_space<vmem>>, vector<32x32xf32>
    tpu.vector_store %arg5[%c0_35, %c0_36], %114 {strides = array<i32>} : memref<32x32xf32, #tpu.memory_space<vmem>>, vector<32x32xf32>,
    return
  }
  func.func @transform_0(%arg0: i32) -> (i32, i32) {
    %c0_i32 = arith.constant 0 : i32
    %c0_i32_0 = arith.constant 0 : i32
    return %arg0, %c0_i32 : i32, i32
  }
  func.func @transform_1(%arg0: i32) -> (i32, i32) {
    %c0_i32 = arith.constant 0 : i32
    %c0_i32_0 = arith.constant 0 : i32
    return %arg0, %c0_i32 : i32, i32
  }
  func.func @transform_2(%arg0: i32) -> (i32, i32) {
    %c0_i32 = arith.constant 0 : i32
    %c0_i32_0 = arith.constant 0 : i32
    %c0_i32_1 = arith.constant 0 : i32
    return %c0_i32, %c0_i32_0 : i32, i32
  }
  func.func @transform_3(%arg0: i32) -> (i32, i32, i32) {
    %c0_i32 = arith.constant 0 : i32
    %c0_i32_0 = arith.constant 0 : i32
    %c0_i32_1 = arith.constant 0 : i32
    %c0_i32_2 = arith.constant 0 : i32
    return %c0_i32, %c0_i32_0, %c0_i32_1 : i32, i32, i32
  }
  func.func @transform_4(%arg0: i32) -> (i32, i32) {
    %c0_i32 = arith.constant 0 : i32
    %c0_i32_0 = arith.constant 0 : i32
    return %arg0, %c0_i32 : i32, i32
  }
}

</mosaic_0001>

<llo_original>
// kernel: tpu_custom_call.1
$region0: #{tpu_custom_call.1}
  #allocation0 [shape = 'u32[]', space=smem, size = 0x4, offset = 0x4, fixed_abs, tag = 'smem constant byte address 0x4 - core index']
  #allocation1 [shape = 'u32[72,128]{1,0:T(1,128)}', space=vmem, size = 0x9000, scoped, tag = 'internal scratch']
  %s0 = inlined_call_operand.vmem [shape: s8[128,128], index: 0, kind: input, shape index: {}]
  %s1 = inlined_call_operand.vmem [shape: f32[128,4], index: 1, kind: input, shape index: {}]
  %s2 = inlined_call_operand.vmem [shape: f32[4,128], index: 2, kind: input, shape index: {}]
  %s3 = inlined_call_operand.vmem [shape: f32[4,128,8], index: 3, kind: input, shape index: {}]
  %s4 = inlined_call_operand.vmem [shape: f32[128,32], index: 4, kind: output, shape index: {}]
  %s5 = sld [smem:[#allocation0]]
  $region49: #{tpu_custom_call.1} parent=0
    _
  %s7 = ssub.s32 1, %s5
  %s8 = scalar_select 0, %s7, %s5
  loop: start=0, step=1, limit=6
  $region2: #{tpu_custom_call.1} parent=0 // loop_pre_header
    _
  $region3: #{tpu_custom_call.1} parent=0 // loop_header
    %s10 = sphi 0, %s14
    %p11 = scmp.ge.s32.totalorder %s10, 6
    %s20 = sphi 0, %s22
    %s23 = sphi 0, %s20
    %s24 = sphi 0, %s23
    %s40 = sphi 0, %s24
    %s46 = sphi 0, %s48
    %s49 = sphi 0, %s46
    %s50 = sphi 0, %s49
    %s66 = sphi 0, %s50
    %s70 = sphi 0, %s70
    %s72 = sphi 0, %s70
    %s73 = sphi 0, %s72
    %s87 = sphi 0, %s73
    %s91 = sphi 0, %s91
    %s93 = sphi 0, %s91
    %s94 = sphi 0, %s93
    %s108 = sphi 0, %s94
    %s114 = sphi 0, %s116
    %s117 = sphi 0, %s114
    %s118 = sphi 0, %s117
    %s134 = sphi 0, %s118
  $region4: #{tpu_custom_call.1} parent=0 // loop_header_branch
    %13 = sbr.rel (%p11) target = $region8
  $region5: #{tpu_custom_call.1} parent=0 // loop_body
    %s15 = ssub.s32 %s10, 1
    %s16 = ssub.s32 %s10, 2
    %s17 = sadd.s32 %s10, 1
    %s18 = ssub.s32 %s10, %s17
    %p19 = scmp.eq.s32.totalorder %s18, 0
    %s21 = sadd.s32 %s20, 1
    %s22 = scalar_select %p19, %s20, %s21
    %p25 = pneg %p19
    %p26 = scmp.eq.s32.totalorder %s10, 3
    %p27 = por %p25, %p26
    %p28 = scmp.ne.s32.totalorder %s20, %s23
    %p29 = scmp.eq.s32.totalorder %s10, 0
    %p30 = por %p28, %p29
    %p31 = scmp.ne.s32.totalorder %s20, %s23
    %p32 = scmp.eq.s32.totalorder %s15, 3
    %p33 = por %p31, %p32
    %p34 = scmp.ne.s32.totalorder %s23, %s24
    %p35 = scmp.eq.s32.totalorder %s15, 0
    %p36 = por %p34, %p35
    %p37 = scmp.ne.s32.totalorder %s23, %s24
    %p38 = scmp.eq.s32.totalorder %s16, 3
    %p39 = por %p37, %p38
    %p41 = scmp.ne.s32.totalorder %s24, %s40
    %p42 = scmp.eq.s32.totalorder %s16, 0
    %p43 = por %p41, %p42
    %s44 = ssub.s32 %s10, %s17
    %p45 = scmp.eq.s32.totalorder %s44, 0
    %s47 = sadd.s32 %s46, 1
    %s48 = scalar_select %p45, %s46, %s47
    %p51 = pneg %p45
    %p52 = scmp.eq.s32.totalorder %s10, 3
    %p53 = por %p51, %p52
    %p54 = scmp.ne.s32.totalorder %s46, %s49
    %p55 = scmp.eq.s32.totalorder %s10, 0
    %p56 = por %p54, %p55
    %p57 = scmp.ne.s32.totalorder %s46, %s49
    %p58 = scmp.eq.s32.totalorder %s15, 3
    %p59 = por %p57, %p58
    %p60 = scmp.ne.s32.totalorder %s49, %s50
    %p61 = scmp.eq.s32.totalorder %s15, 0
    %p62 = por %p60, %p61
    %p63 = scmp.ne.s32.totalorder %s49, %s50
    %p64 = scmp.eq.s32.totalorder %s16, 3
    %p65 = por %p63, %p64
    %p67 = scmp.ne.s32.totalorder %s50, %s66
    %p68 = scmp.eq.s32.totalorder %s16, 0
    %p69 = por %p67, %p68
    %s71 = sadd.s32 %s70, 1
    %p74 = scmp.eq.s32.totalorder %s10, 3
    %p75 = scmp.ne.s32.totalorder %s70, %s72
    %p76 = scmp.eq.s32.totalorder %s10, 0
    %p77 = por %p75, %p76
    %p78 = scmp.ne.s32.totalorder %s70, %s72
    %p79 = scmp.eq.s32.totalorder %s15, 3
    %p80 = por %p78, %p79
    %p81 = scmp.ne.s32.totalorder %s72, %s73
    %p82 = scmp.eq.s32.totalorder %s15, 0
    %p83 = por %p81, %p82
    %p84 = scmp.ne.s32.totalorder %s72, %s73
    %p85 = scmp.eq.s32.totalorder %s16, 3
    %p86 = por %p84, %p85
    %p88 = scmp.ne.s32.totalorder %s73, %s87
    %p89 = scmp.eq.s32.totalorder %s16, 0
    %p90 = por %p88, %p89
    %s92 = sadd.s32 %s91, 1
    %p95 = scmp.eq.s32.totalorder %s10, 3
    %p96 = scmp.ne.s32.totalorder %s91, %s93
    %p97 = scmp.eq.s32.totalorder %s10, 0
    %p98 = por %p96, %p97
    %p99 = scmp.ne.s32.totalorder %s91, %s93
    %p100 = scmp.eq.s32.totalorder %s15, 3
    %p101 = por %p99, %p100
    %p102 = scmp.ne.s32.totalorder %s93, %s94
    %p103 = scmp.eq.s32.totalorder %s15, 0
    %p104 = por %p102, %p103
    %p105 = scmp.ne.s32.totalorder %s93, %s94
    %p106 = scmp.eq.s32.totalorder %s16, 3
    %p107 = por %p105, %p106
    %p109 = scmp.ne.s32.totalorder %s94, %s108
    %p110 = scmp.eq.s32.totalorder %s16, 0
    %p111 = por %p109, %p110
    %s112 = ssub.s32 %s10, %s17
    %p113 = scmp.eq.s32.totalorder %s112, 0
    %s115 = sadd.s32 %s114, 1
    %s116 = scalar_select %p113, %s114, %s115
    %p119 = pneg %p113
    %p120 = scmp.eq.s32.totalorder %s10, 3
    %p121 = por %p119, %p120
    %p122 = scmp.ne.s32.totalorder %s114, %s117
    %p123 = scmp.eq.s32.totalorder %s10, 0
    %p124 = por %p122, %p123
    %p125 = scmp.ne.s32.totalorder %s114, %s117
    %p126 = scmp.eq.s32.totalorder %s15, 3
    %p127 = por %p125, %p126
    %p128 = scmp.ne.s32.totalorder %s117, %s118
    %p129 = scmp.eq.s32.totalorder %s15, 0
    %p130 = por %p128, %p129
    %p131 = scmp.ne.s32.totalorder %s117, %s118
    %p132 = scmp.eq.s32.totalorder %s16, 3
    %p133 = por %p131, %p132
    %p135 = scmp.ne.s32.totalorder %s118, %s134
    %p136 = scmp.eq.s32.totalorder %s16, 0
    %p137 = por %p135, %p136
    %p138 = scmp.le.s32.totalorder 1, %s10
    %p139 = scmp.lt.s32.totalorder %s10, 5
    %p140 = pnand %p138, %p139
    %p141 = pneg %p140
    // Predicated region
    $region9: #{tpu_custom_call.1} parent=5 // pred_check
      _
    $region10: #{tpu_custom_call.1} parent=5 // pred_check_branch
      %143 = sbr.rel (%p140) target = $region12
    $region11: #{tpu_custom_call.1} parent=5 // pred_region
      %s144 = ssub.s32 %s10, 1
      // Predicated region
      $region13: #{tpu_custom_call.1} parent=11 // pred_check
        %p145 = pneg %p83
      $region14: #{tpu_custom_call.1} parent=11 // pred_check_branch
        %147 = sbr.rel (%p145) target = $region16
      $region15: #{tpu_custom_call.1} parent=11 // pred_region
        _
      $region16: #{tpu_custom_call.1} parent=11 // pred_fallthru
        _
      // Predicated region
      $region17: #{tpu_custom_call.1} parent=11 // pred_check
        %p148 = pneg %p104
      $region18: #{tpu_custom_call.1} parent=11 // pred_check_branch
        %150 = sbr.rel (%p148) target = $region20
      $region19: #{tpu_custom_call.1} parent=11 // pred_region
        _
      $region20: #{tpu_custom_call.1} parent=11 // pred_fallthru
        _
    $region12: #{tpu_custom_call.1} parent=5 // pred_fallthru
      _
    %p151 = scmp.lt.s32.totalorder %s10, 4
    // Predicated region
    $region21: #{tpu_custom_call.1} parent=5 // pred_check
      %p152 = pneg %p151
    $region22: #{tpu_custom_call.1} parent=5 // pred_check_branch
      %154 = sbr.rel (%p152) target = $region24
    $region23: #{tpu_custom_call.1} parent=5 // pred_region
      // Predicated region
      $region25: #{tpu_custom_call.1} parent=23 // pred_check
        %p155 = pneg %p30
      $region26: #{tpu_custom_call.1} parent=23 // pred_check_branch
        %157 = sbr.rel (%p155) target = $region28
      $region27: #{tpu_custom_call.1} parent=23 // pred_region
        %p158 = scmp.lt.s32.totalorder %s10, 3
        %s159 = scalar_select %p158, %s10, 3
        %s160 = smul.addr %s159, 8
        %s161 = scalar_lea.vmem %s0, %s160
      $region28: #{tpu_custom_call.1} parent=23 // pred_fallthru
        _
      // Predicated region
      $region29: #{tpu_custom_call.1} parent=23 // pred_check
        %p162 = pneg %p56
      $region30: #{tpu_custom_call.1} parent=23 // pred_check_branch
        %164 = sbr.rel (%p162) target = $region32
      $region31: #{tpu_custom_call.1} parent=23 // pred_region
        %s165 = smul.u32 4, %s10
        %p166 = scmp.lt.s32.totalorder %s165, 15
        %s167 = scalar_select %p166, %s165, 15
        %s168 = smul.addr %s167, 8
        %s169 = scalar_lea.vmem %s1, %s168
        %s170 = smul.u32 4, %s10
      $region32: #{tpu_custom_call.1} parent=23 // pred_fallthru
        _
    $region24: #{tpu_custom_call.1} parent=5 // pred_fallthru
      _
    %p171 = scmp.le.s32.totalorder 1, %s10
    %p172 = scmp.lt.s32.totalorder %s10, 5
    %p173 = pnand %p171, %p172
    %p174 = pneg %p173
    // Predicated region
    $region33: #{tpu_custom_call.1} parent=5 // pred_check
      _
    $region34: #{tpu_custom_call.1} parent=5 // pred_check_branch
      %176 = sbr.rel (%p173) target = $region36
    $region35: #{tpu_custom_call.1} parent=5 // pred_region
      %s177 = ssub.s32 %s10, 1
      %p178 = scmp.lt.s32.totalorder %s15, 3
      %s179 = scalar_select %p178, %s15, 3
      %s180 = smul.addr %s179, 8
      %s181 = scalar_lea.vmem %s0, %s180
      %p182 = pneg %p36
      %p183 = pneg %p33
      %s184 = smul.u32 4, %s15
      %p185 = scmp.lt.s32.totalorder %s184, 15
      %s186 = scalar_select %p185, %s184, 15
      %s187 = smul.addr %s186, 8
      %s188 = scalar_lea.vmem %s1, %s187
      %p189 = pneg %p62
      %p190 = pneg %p59
      %p191 = pneg %p83
      %p192 = pneg %p80
      %p193 = pneg %p104
      %p194 = pneg %p101
      %p195 = pneg %p130
      %p196 = pneg %p127
      %s197 = smul.u32 4, %s15
      %p198 = scmp.lt.s32.totalorder %s197, 15
      %s199 = scalar_select %p198, %s197, 15
      %s200 = smul.addr %s199, 8
      %s201 = scalar_lea.vmem %s4, %s200
      %p202 = scmp.lt.s32.totalorder %s15, 3
      %s203 = scalar_select %p202, %s15, 3
      %s204 = smul.addr %s203, 8
      %s205 = scalar_lea.vmem %s0, %s204
      %s206 = smul.u32 4, %s15
      %p207 = scmp.lt.s32.totalorder %s206, 15
      %s208 = scalar_select %p207, %s206, 15
      %s209 = smul.addr %s208, 8
      %s210 = scalar_lea.vmem %s1, %s209
      %s211 = smul.u32 4, %s15
      %s212 = smul.u32 4, %s15
      %p213 = scmp.lt.s32.totalorder %s212, 15
      %s214 = scalar_select %p213, %s212, 15
      %s215 = smul.addr %s214, 8
      %s216 = scalar_lea.vmem %s4, %s215
      %s217 = smul.u32 4, %s15
      %v218 = vld [vmem:[%s205] sm:$0xff]
      %v219 = vunpack.c.0.s8 %v218
      %v220 = vunpack.c.1.s8 %v218
      %v221 = vunpack.c.2.s8 %v218
      %v222 = vunpack.c.3.s8 %v218
      %v223 = vcvt.s32.f32 %v219
      %v224 = vcvt.s32.f32 %v220
      %v225 = vcvt.s32.f32 %v221
      %v226 = vcvt.s32.f32 %v222
      %v227 = vpack.c.bf16 %v223, %v223
      %v228 = vpack.c.bf16 %v224, %v224
      %v229 = vpack.c.bf16 %v225, %v225
      %v230 = vpack.c.bf16 %v226, %v226
      %v231 = vunpack.c.l.bf16 %v227
      %v232 = vunpack.c.l.bf16 %v228
      %v233 = vunpack.c.l.bf16 %v229
      %v234 = vunpack.c.l.bf16 %v230
      %v235 = vmul.f32 %v231, 9.9824435e+08
      %v236 = vmul.f32 %v232, 9.9824435e+08
      %v237 = vmul.f32 %v233, 9.9824435e+08
      %v238 = vmul.f32 %v234, 9.9824435e+08
      %v239 = vpack.c.bf16 %v235, %v235
      %v240 = vpack.c.bf16 %v236, %v236
      %v241 = vpack.c.bf16 %v237, %v237
      %v242 = vpack.c.bf16 %v238, %v238
      %v243 = vunpack.c.l.bf16 %v239
      %v244 = vunpack.c.l.bf16 %v240
      %v245 = vunpack.c.l.bf16 %v241
      %v246 = vunpack.c.l.bf16 %v242
      %v247 = vsub.f32 %v243, 9.9824435e+08
      %v248 = vsub.f32 %v244, 9.9824435e+08
      %v249 = vsub.f32 %v245, 9.9824435e+08
      %v250 = vsub.f32 %v246, 9.9824435e+08
      %v251 = vpack.c.bf16 %v247, %v247
      %v252 = vpack.c.bf16 %v248, %v248
      %v253 = vpack.c.bf16 %v249, %v249
      %v254 = vpack.c.bf16 %v250, %v250
      %v255 = vld [vmem:[%s210] sm:$0xff]
      %v256 = vld [vmem:[%s210 + $0x8] sm:$0xff]
      %v257 = vld [vmem:[%s210 + $0x10] sm:$0xff]
      %v258 = vld [vmem:[%s210 + $0x18] sm:$0xff]
      %v259 = vpack.c.bf16 %v255, %v255
      %v260 = vpack.c.bf16 %v256, %v256
      %v261 = vpack.c.bf16 %v257, %v257
      %v262 = vpack.c.bf16 %v258, %v258
      %v263 = vld [vmem:[%s2] sm:$0xf]
      %v264 = vpack.c.bf16 %v263, %v263
      %266 = vset.pattern.permute.xlu0 0
      %267 = vperm.xlu0 %266, %v259
      %v268 = vpop.permute.xlu0 %267
      %v271 = vunpack.c.l.s4 839922192
      %v272 = vunpack.c.0.s8 %v271
      %v273 = vperm.slane %v268, %v272
      %275 = vset.pattern.permute.xlu0 0
      %276 = vperm.xlu0 %275, %v260
      %v277 = vpop.permute.xlu0 %276
      %v280 = vunpack.c.l.s4 839922192
      %v281 = vunpack.c.0.s8 %v280
      %v282 = vperm.slane %v277, %v281
      %284 = vset.pattern.permute.xlu0 0
      %285 = vperm.xlu0 %284, %v261
      %v286 = vpop.permute.xlu0 %285
      %v289 = vunpack.c.l.s4 839922192
      %v290 = vunpack.c.0.s8 %v289
      %v291 = vperm.slane %v286, %v290
      %293 = vset.pattern.permute.xlu0 0
      %294 = vperm.xlu0 %293, %v262
      %v295 = vpop.permute.xlu0 %294
      %v298 = vunpack.c.l.s4 839922192
      %v299 = vunpack.c.0.s8 %v298
      %v300 = vperm.slane %v295, %v299
      %v302 = vpack.i.b16 %v264, %v264
      %v304 = vperm.slane %v302, 0
      %v305 = vunpack.c.l.bf16 %v273
      %v306 = vunpack.c.l.bf16 %v282
      %v307 = vunpack.c.l.bf16 %v291
      %v308 = vunpack.c.l.bf16 %v300
      %v309 = vunpack.c.l.bf16 %v304
      %v310 = vadd.f32 %v305, %v309
      %v311 = vadd.f32 %v306, %v309
      %v312 = vadd.f32 %v307, %v309
      %v313 = vadd.f32 %v308, %v309
      %v314 = vpack.c.bf16 %v310, %v310
      %v315 = vpack.c.bf16 %v311, %v311
      %v316 = vpack.c.bf16 %v312, %v312
      %v317 = vpack.c.bf16 %v313, %v313
      %v318 = vunpack.c.l.bf16 %v314
      %v319 = vunpack.c.l.bf16 %v315
      %v320 = vunpack.c.l.bf16 %v316
      %v321 = vunpack.c.l.bf16 %v317
      %v322 = vmul.f32 %v318, 0.20019531
      %v323 = vmul.f32 %v319, 0.20019531
      %v324 = vmul.f32 %v320, 0.20019531
      %v325 = vmul.f32 %v321, 0.20019531
      %v326 = vpack.c.bf16 %v322, %v322
      %v327 = vpack.c.bf16 %v323, %v323
      %v328 = vpack.c.bf16 %v324, %v324
      %v329 = vpack.c.bf16 %v325, %v325
      %v330 = vunpack.c.l.bf16 %v326
      %v331 = vunpack.c.l.bf16 %v327
      %v332 = vunpack.c.l.bf16 %v328
      %v333 = vunpack.c.l.bf16 %v329
      %v334 = vmax.f32 %v318, %v330
      %v335 = vmax.f32 %v319, %v331
      %v336 = vmax.f32 %v320, %v332
      %v337 = vmax.f32 %v321, %v333
      %v338 = vpack.c.bf16 %v334, %v334
      %v339 = vpack.c.bf16 %v335, %v335
      %v340 = vpack.c.bf16 %v336, %v336
      %v341 = vpack.c.bf16 %v337, %v337
      %v342 = vunpack.c.l.bf16 %v338
      %v343 = vunpack.c.l.bf16 %v339
      %v344 = vunpack.c.l.bf16 %v340
      %v345 = vunpack.c.l.bf16 %v341
      %v346 = vunpack.c.l.bf16 %v251
      %v347 = vunpack.c.l.bf16 %v252
      %v348 = vunpack.c.l.bf16 %v253
      %v349 = vunpack.c.l.bf16 %v254
      %v350 = vadd.f32 %v342, %v346
      %v351 = vadd.f32 %v343, %v347
      %v352 = vadd.f32 %v344, %v348
      %v353 = vadd.f32 %v345, %v349
      %v354 = vpack.c.bf16 %v350, %v350
      %v355 = vpack.c.bf16 %v351, %v351
      %v356 = vpack.c.bf16 %v352, %v352
      %v357 = vpack.c.bf16 %v353, %v353
      %v358 = vunpack.c.l.bf16 %v354
      %v359 = vunpack.c.l.bf16 %v355
      %v360 = vunpack.c.l.bf16 %v356
      %v361 = vunpack.c.l.bf16 %v357
      %362 = vmax.xlane.f32.xlu0 %v358
      %v363 = vpop.xlane.xlu0 %362
      %364 = vmax.xlane.f32.xlu0 %v359
      %v365 = vpop.xlane.xlu0 %364
      %366 = vmax.xlane.f32.xlu0 %v360
      %v367 = vpop.xlane.xlu0 %366
      %368 = vmax.xlane.f32.xlu0 %v361
      %v369 = vpop.xlane.xlu0 %368
      %v370 = vpack.c.bf16 %v363, %v363
      %v371 = vpack.c.bf16 %v365, %v365
      %v372 = vpack.c.bf16 %v367, %v367
      %v373 = vpack.c.bf16 %v369, %v369
      %v374 = vunpack.c.l.bf16 %v370
      %v375 = vunpack.c.l.bf16 %v371
      %v376 = vunpack.c.l.bf16 %v372
      %v377 = vunpack.c.l.bf16 %v373
      %v378 = vsub.f32 %v358, %v374
      %v379 = vsub.f32 %v359, %v375
      %v380 = vsub.f32 %v360, %v376
      %v381 = vsub.f32 %v361, %v377
      %v382 = vpack.c.bf16 %v379, %v378
      %v383 = vpack.c.bf16 %v381, %v380
      %v384 = vunpack.c.l.bf16 %v382
      %v385 = vunpack.c.h.bf16 %v382
      %v386 = vunpack.c.l.bf16 %v383
      %v387 = vunpack.c.h.bf16 %v383
      %v388 = vmul.f32 %v384, 1.442695
      %v389 = vpow.pop %v388
      %v390 = vmul.f32 %v385, 1.442695
      %v391 = vpow.pop %v390
      %v392 = vmul.f32 %v386, 1.442695
      %v393 = vpow.pop %v392
      %v394 = vmul.f32 %v387, 1.442695
      %v395 = vpow.pop %v394
      %v396 = vpack.c.bf16 %v391, %v389
      %v397 = vpack.c.bf16 %v395, %v393
      %v398 = vunpack.c.l.bf16 %v396
      %v399 = vunpack.c.h.bf16 %v396
      %v400 = vunpack.c.l.bf16 %v397
      %v401 = vunpack.c.h.bf16 %v397
      %402 = vadd.xlane.f32.xlu0 %v398
      %v403 = vpop.xlane.xlu0 %402
      %404 = vadd.xlane.f32.xlu0 %v399
      %v405 = vpop.xlane.xlu0 %404
      %406 = vadd.xlane.f32.xlu0 %v400
      %v407 = vpop.xlane.xlu0 %406
      %408 = vadd.xlane.f32.xlu0 %v401
      %v409 = vpop.xlane.xlu0 %408
      %v410 = vadd.f32 %v403, 1e-16
      %v411 = vadd.f32 %v405, 1e-16
      %v412 = vadd.f32 %v407, 1e-16
      %v413 = vadd.f32 %v409, 1e-16
      %v414 = vld [vmem:[%s3] sm:$0xff]
      %v415 = vld [vmem:[%s3 + $0x8] sm:$0xff]
      %v416 = vld [vmem:[%s3 + $0x10] sm:$0xff]
      %v417 = vld [vmem:[%s3 + $0x18] sm:$0xff]
      %v418 = vld [vmem:[%s3 + $0x20] sm:$0xff]
      %v419 = vld [vmem:[%s3 + $0x28] sm:$0xff]
      %v420 = vld [vmem:[%s3 + $0x30] sm:$0xff]
      %v421 = vld [vmem:[%s3 + $0x38] sm:$0xff]
      %v422 = vld [vmem:[%s3 + $0x40] sm:$0xff]
      %v423 = vld [vmem:[%s3 + $0x48] sm:$0xff]
      %v424 = vld [vmem:[%s3 + $0x50] sm:$0xff]
      %v425 = vld [vmem:[%s3 + $0x58] sm:$0xff]
      %v426 = vld [vmem:[%s3 + $0x60] sm:$0xff]
      %v427 = vld [vmem:[%s3 + $0x68] sm:$0xff]
      %v428 = vld [vmem:[%s3 + $0x70] sm:$0xff]
      %v429 = vld [vmem:[%s3 + $0x78] sm:$0xff]
      %v430 = vpack.c.bf16 %v415, %v414
      %v431 = vpack.c.bf16 %v417, %v416
      %v432 = vpack.c.bf16 %v419, %v418
      %v433 = vpack.c.bf16 %v421, %v420
      %v434 = vpack.c.bf16 %v423, %v422
      %v435 = vpack.c.bf16 %v425, %v424
      %v436 = vpack.c.bf16 %v427, %v426
      %v437 = vpack.c.bf16 %v429, %v428
      %438 = vmatpush.bf16.msra.mxu0 %v437
      %439 = vmatpush.bf16.msra.mxu0 %v436
      %440 = vmatpush.bf16.msra.mxu0 %v435
      %441 = vmatpush.bf16.msra.mxu0 %v434
      %442 = vmatpush.bf16.msra.mxu0 %v433
      %443 = vmatpush.bf16.msra.mxu0 %v432
      %444 = vmatpush.bf16.msra.mxu0 %v431
      %445 = vmatpush.bf16.msra.mxu0 %v430
      %446 = vmatmul.bf16.gmra.mxu0 %v396
      %v447 = vpop.f32.mrf.mxu0
      %v448 = vadd.f32 0.0, %v447
      %v449 = vpop.f32.mrf.mxu0
      %v450 = vadd.f32 0.0, %v449
      %451 = vmatmul.bf16.gmra.mxu0 %v397
      %v452 = vpop.f32.mrf.mxu0
      %v453 = vadd.f32 0.0, %v452
      %v454 = vpop.f32.mrf.mxu0
      %v455 = vadd.f32 0.0, %v454
      %456 = vdwg.mxu0
      %v457 = vrcp.pop %v410
      %v458 = vrcp.pop %v411
      %v459 = vrcp.pop %v412
      %v460 = vrcp.pop %v413
      %v461 = vmul.f32 %v448, %v457
      %v462 = vmul.f32 %v450, %v458
      %v463 = vmul.f32 %v453, %v459
      %v464 = vmul.f32 %v455, %v460
      %465 = vset.pattern.permute.xlu0 1
      %466 = vperm.xlu0 %465, %v259
      %v467 = vpop.permute.xlu0 %466
      %v470 = vunpack.c.l.s4 839922192
      %v471 = vunpack.c.0.s8 %v470
      %v472 = vperm.slane %v467, %v471
      %473 = vset.pattern.permute.xlu0 1
      %474 = vperm.xlu0 %473, %v260
      %v475 = vpop.permute.xlu0 %474
      %v478 = vunpack.c.l.s4 839922192
      %v479 = vunpack.c.0.s8 %v478
      %v480 = vperm.slane %v475, %v479
      %481 = vset.pattern.permute.xlu0 1
      %482 = vperm.xlu0 %481, %v261
      %v483 = vpop.permute.xlu0 %482
      %v486 = vunpack.c.l.s4 839922192
      %v487 = vunpack.c.0.s8 %v486
      %v488 = vperm.slane %v483, %v487
      %489 = vset.pattern.permute.xlu0 1
      %490 = vperm.xlu0 %489, %v262
      %v491 = vpop.permute.xlu0 %490
      %v494 = vunpack.c.l.s4 839922192
      %v495 = vunpack.c.0.s8 %v494
      %v496 = vperm.slane %v491, %v495
      %v497 = vshrl.u32 %v264, 16
      %v498 = vpack.i.b16 %v497, %v497
      %v500 = vperm.slane %v498, 0
      %v501 = vunpack.c.l.bf16 %v472
      %v502 = vunpack.c.l.bf16 %v480
      %v503 = vunpack.c.l.bf16 %v488
      %v504 = vunpack.c.l.bf16 %v496
      %v505 = vunpack.c.l.bf16 %v500
      %v506 = vadd.f32 %v501, %v505
      %v507 = vadd.f32 %v502, %v505
      %v508 = vadd.f32 %v503, %v505
      %v509 = vadd.f32 %v504, %v505
      %v510 = vpack.c.bf16 %v506, %v506
      %v511 = vpack.c.bf16 %v507, %v507
      %v512 = vpack.c.bf16 %v508, %v508
      %v513 = vpack.c.bf16 %v509, %v509
      %v514 = vunpack.c.l.bf16 %v510
      %v515 = vunpack.c.l.bf16 %v511
      %v516 = vunpack.c.l.bf16 %v512
      %v517 = vunpack.c.l.bf16 %v513
      %v518 = vmul.f32 %v514, 0.20019531
      %v519 = vmul.f32 %v515, 0.20019531
      %v520 = vmul.f32 %v516, 0.20019531
      %v521 = vmul.f32 %v517, 0.20019531
      %v522 = vpack.c.bf16 %v518, %v518
      %v523 = vpack.c.bf16 %v519, %v519
      %v524 = vpack.c.bf16 %v520, %v520
      %v525 = vpack.c.bf16 %v521, %v521
      %v526 = vunpack.c.l.bf16 %v522
      %v527 = vunpack.c.l.bf16 %v523
      %v528 = vunpack.c.l.bf16 %v524
      %v529 = vunpack.c.l.bf16 %v525
      %v530 = vmax.f32 %v514, %v526
      %v531 = vmax.f32 %v515, %v527
      %v532 = vmax.f32 %v516, %v528
      %v533 = vmax.f32 %v517, %v529
      %v534 = vpack.c.bf16 %v530, %v530
      %v535 = vpack.c.bf16 %v531, %v531
      %v536 = vpack.c.bf16 %v532, %v532
      %v537 = vpack.c.bf16 %v533, %v533
      %v538 = vunpack.c.l.bf16 %v534
      %v539 = vunpack.c.l.bf16 %v535
      %v540 = vunpack.c.l.bf16 %v536
      %v541 = vunpack.c.l.bf16 %v537
      %v542 = vadd.f32 %v538, %v346
      %v543 = vadd.f32 %v539, %v347
      %v544 = vadd.f32 %v540, %v348
      %v545 = vadd.f32 %v541, %v349
      %v546 = vpack.c.bf16 %v542, %v542
      %v547 = vpack.c.bf16 %v543, %v543
      %v548 = vpack.c.bf16 %v544, %v544
      %v549 = vpack.c.bf16 %v545, %v545
      %v550 = vunpack.c.l.bf16 %v546
      %v551 = vunpack.c.l.bf16 %v547
      %v552 = vunpack.c.l.bf16 %v548
      %v553 = vunpack.c.l.bf16 %v549
      %554 = vmax.xlane.f32.xlu0 %v550
      %v555 = vpop.xlane.xlu0 %554
      %556 = vmax.xlane.f32.xlu0 %v551
      %v557 = vpop.xlane.xlu0 %556
      %558 = vmax.xlane.f32.xlu0 %v552
      %v559 = vpop.xlane.xlu0 %558
      %560 = vmax.xlane.f32.xlu0 %v553
      %v561 = vpop.xlane.xlu0 %560
      %v562 = vpack.c.bf16 %v555, %v555
      %v563 = vpack.c.bf16 %v557, %v557
      %v564 = vpack.c.bf16 %v559, %v559
      %v565 = vpack.c.bf16 %v561, %v561
      %v566 = vunpack.c.l.bf16 %v562
      %v567 = vunpack.c.l.bf16 %v563
      %v568 = vunpack.c.l.bf16 %v564
      %v569 = vunpack.c.l.bf16 %v565
      %v570 = vsub.f32 %v550, %v566
      %v571 = vsub.f32 %v551, %v567
      %v572 = vsub.f32 %v552, %v568
      %v573 = vsub.f32 %v553, %v569
      %v574 = vpack.c.bf16 %v571, %v570
      %v575 = vpack.c.bf16 %v573, %v572
      %v576 = vunpack.c.l.bf16 %v574
      %v577 = vunpack.c.h.bf16 %v574
      %v578 = vunpack.c.l.bf16 %v575
      %v579 = vunpack.c.h.bf16 %v575
      %v580 = vmul.f32 %v576, 1.442695
      %v581 = vpow.pop %v580
      %v582 = vmul.f32 %v577, 1.442695
      %v583 = vpow.pop %v582
      %v584 = vmul.f32 %v578, 1.442695
      %v585 = vpow.pop %v584
      %v586 = vmul.f32 %v579, 1.442695
      %v587 = vpow.pop %v586
      %v588 = vpack.c.bf16 %v583, %v581
      %v589 = vpack.c.bf16 %v587, %v585
      %v590 = vunpack.c.l.bf16 %v588
      %v591 = vunpack.c.h.bf16 %v588
      %v592 = vunpack.c.l.bf16 %v589
      %v593 = vunpack.c.h.bf16 %v589
      %594 = vadd.xlane.f32.xlu0 %v590
      %v595 = vpop.xlane.xlu0 %594
      %596 = vadd.xlane.f32.xlu0 %v591
      %v597 = vpop.xlane.xlu0 %596
      %598 = vadd.xlane.f32.xlu0 %v592
      %v599 = vpop.xlane.xlu0 %598
      %600 = vadd.xlane.f32.xlu0 %v593
      %v601 = vpop.xlane.xlu0 %600
      %v602 = vadd.f32 %v595, 1e-16
      %v603 = vadd.f32 %v597, 1e-16
      %v604 = vadd.f32 %v599, 1e-16
      %v605 = vadd.f32 %v601, 1e-16
      %s606 = scalar_lea.vmem %s3, 128
      %v607 = vld [vmem:[%s606] sm:$0xff]
      %v608 = vld [vmem:[%s606 + $0x8] sm:$0xff]
      %v609 = vld [vmem:[%s606 + $0x10] sm:$0xff]
      %v610 = vld [vmem:[%s606 + $0x18] sm:$0xff]
      %v611 = vld [vmem:[%s606 + $0x20] sm:$0xff]
      %v612 = vld [vmem:[%s606 + $0x28] sm:$0xff]
      %v613 = vld [vmem:[%s606 + $0x30] sm:$0xff]
      %v614 = vld [vmem:[%s606 + $0x38] sm:$0xff]
      %v615 = vld [vmem:[%s606 + $0x40] sm:$0xff]
      %v616 = vld [vmem:[%s606 + $0x48] sm:$0xff]
      %v617 = vld [vmem:[%s606 + $0x50] sm:$0xff]
      %v618 = vld [vmem:[%s606 + $0x58] sm:$0xff]
      %v619 = vld [vmem:[%s606 + $0x60] sm:$0xff]
      %v620 = vld [vmem:[%s606 + $0x68] sm:$0xff]
      %v621 = vld [vmem:[%s606 + $0x70] sm:$0xff]
      %v622 = vld [vmem:[%s606 + $0x78] sm:$0xff]
      %v623 = vpack.c.bf16 %v608, %v607
      %v624 = vpack.c.bf16 %v610, %v609
      %v625 = vpack.c.bf16 %v612, %v611
      %v626 = vpack.c.bf16 %v614, %v613
      %v627 = vpack.c.bf16 %v616, %v615
      %v628 = vpack.c.bf16 %v618, %v617
      %v629 = vpack.c.bf16 %v620, %v619
      %v630 = vpack.c.bf16 %v622, %v621
      %631 = vmatpush.bf16.msra.mxu0 %v630
      %632 = vmatpush.bf16.msra.mxu0 %v629
      %633 = vmatpush.bf16.msra.mxu0 %v628
      %634 = vmatpush.bf16.msra.mxu0 %v627
      %635 = vmatpush.bf16.msra.mxu0 %v626
      %636 = vmatpush.bf16.msra.mxu0 %v625
      %637 = vmatpush.bf16.msra.mxu0 %v624
      %638 = vmatpush.bf16.msra.mxu0 %v623
      %639 = vmatmul.bf16.gmra.mxu0 %v588
      %v640 = vpop.f32.mrf.mxu0
      %v641 = vadd.f32 0.0, %v640
      %v642 = vpop.f32.mrf.mxu0
      %v643 = vadd.f32 0.0, %v642
      %644 = vmatmul.bf16.gmra.mxu0 %v589
      %v645 = vpop.f32.mrf.mxu0
      %v646 = vadd.f32 0.0, %v645
      %v647 = vpop.f32.mrf.mxu0
      %v648 = vadd.f32 0.0, %v647
      %649 = vdwg.mxu0
      %v650 = vrcp.pop %v602
      %v651 = vrcp.pop %v603
      %v652 = vrcp.pop %v604
      %v653 = vrcp.pop %v605
      %v654 = vmul.f32 %v641, %v650
      %v655 = vmul.f32 %v643, %v651
      %v656 = vmul.f32 %v646, %v652
      %v657 = vmul.f32 %v648, %v653
      %658 = vset.pattern.permute.xlu0 2
      %659 = vperm.xlu0 %658, %v259
      %v660 = vpop.permute.xlu0 %659
      %v663 = vunpack.c.l.s4 839922192
      %v664 = vunpack.c.0.s8 %v663
      %v665 = vperm.slane %v660, %v664
      %666 = vset.pattern.permute.xlu0 2
      %667 = vperm.xlu0 %666, %v260
      %v668 = vpop.permute.xlu0 %667
      %v671 = vunpack.c.l.s4 839922192
      %v672 = vunpack.c.0.s8 %v671
      %v673 = vperm.slane %v668, %v672
      %674 = vset.pattern.permute.xlu0 2
      %675 = vperm.xlu0 %674, %v261
      %v676 = vpop.permute.xlu0 %675
      %v679 = vunpack.c.l.s4 839922192
      %v680 = vunpack.c.0.s8 %v679
      %v681 = vperm.slane %v676, %v680
      %682 = vset.pattern.permute.xlu0 2
      %683 = vperm.xlu0 %682, %v262
      %v684 = vpop.permute.xlu0 %683
      %v687 = vunpack.c.l.s4 839922192
      %v688 = vunpack.c.0.s8 %v687
      %v689 = vperm.slane %v684, %v688
      %v690 = vperm.slane %v302, 1
      %v691 = vunpack.c.l.bf16 %v665
      %v692 = vunpack.c.l.bf16 %v673
      %v693 = vunpack.c.l.bf16 %v681
      %v694 = vunpack.c.l.bf16 %v689
      %v695 = vunpack.c.l.bf16 %v690
      %v696 = vadd.f32 %v691, %v695
      %v697 = vadd.f32 %v692, %v695
      %v698 = vadd.f32 %v693, %v695
      %v699 = vadd.f32 %v694, %v695
      %v700 = vpack.c.bf16 %v696, %v696
      %v701 = vpack.c.bf16 %v697, %v697
      %v702 = vpack.c.bf16 %v698, %v698
      %v703 = vpack.c.bf16 %v699, %v699
      %v704 = vunpack.c.l.bf16 %v700
      %v705 = vunpack.c.l.bf16 %v701
      %v706 = vunpack.c.l.bf16 %v702
      %v707 = vunpack.c.l.bf16 %v703
      %v708 = vmul.f32 %v704, 0.20019531
      %v709 = vmul.f32 %v705, 0.20019531
      %v710 = vmul.f32 %v706, 0.20019531
      %v711 = vmul.f32 %v707, 0.20019531
      %v712 = vpack.c.bf16 %v708, %v708
      %v713 = vpack.c.bf16 %v709, %v709
      %v714 = vpack.c.bf16 %v710, %v710
      %v715 = vpack.c.bf16 %v711, %v711
      %v716 = vunpack.c.l.bf16 %v712
      %v717 = vunpack.c.l.bf16 %v713
      %v718 = vunpack.c.l.bf16 %v714
      %v719 = vunpack.c.l.bf16 %v715
      %v720 = vmax.f32 %v704, %v716
      %v721 = vmax.f32 %v705, %v717
      %v722 = vmax.f32 %v706, %v718
      %v723 = vmax.f32 %v707, %v719
      %v724 = vpack.c.bf16 %v720, %v720
      %v725 = vpack.c.bf16 %v721, %v721
      %v726 = vpack.c.bf16 %v722, %v722
      %v727 = vpack.c.bf16 %v723, %v723
      %v728 = vunpack.c.l.bf16 %v724
      %v729 = vunpack.c.l.bf16 %v725
      %v730 = vunpack.c.l.bf16 %v726
      %v731 = vunpack.c.l.bf16 %v727
      %v732 = vadd.f32 %v728, %v346
      %v733 = vadd.f32 %v729, %v347
      %v734 = vadd.f32 %v730, %v348
      %v735 = vadd.f32 %v731, %v349
      %v736 = vpack.c.bf16 %v732, %v732
      %v737 = vpack.c.bf16 %v733, %v733
      %v738 = vpack.c.bf16 %v734, %v734
      %v739 = vpack.c.bf16 %v735, %v735
      %v740 = vunpack.c.l.bf16 %v736
      %v741 = vunpack.c.l.bf16 %v737
      %v742 = vunpack.c.l.bf16 %v738
      %v743 = vunpack.c.l.bf16 %v739
      %744 = vmax.xlane.f32.xlu0 %v740
      %v745 = vpop.xlane.xlu0 %744
      %746 = vmax.xlane.f32.xlu0 %v741
      %v747 = vpop.xlane.xlu0 %746
      %748 = vmax.xlane.f32.xlu0 %v742
      %v749 = vpop.xlane.xlu0 %748
      %750 = vmax.xlane.f32.xlu0 %v743
      %v751 = vpop.xlane.xlu0 %750
      %v752 = vpack.c.bf16 %v745, %v745
      %v753 = vpack.c.bf16 %v747, %v747
      %v754 = vpack.c.bf16 %v749, %v749
      %v755 = vpack.c.bf16 %v751, %v751
      %v756 = vunpack.c.l.bf16 %v752
      %v757 = vunpack.c.l.bf16 %v753
      %v758 = vunpack.c.l.bf16 %v754
      %v759 = vunpack.c.l.bf16 %v755
      %v760 = vsub.f32 %v740, %v756
      %v761 = vsub.f32 %v741, %v757
      %v762 = vsub.f32 %v742, %v758
      %v763 = vsub.f32 %v743, %v759
      %v764 = vpack.c.bf16 %v761, %v760
      %v765 = vpack.c.bf16 %v763, %v762
      %v766 = vunpack.c.l.bf16 %v764
      %v767 = vunpack.c.h.bf16 %v764
      %v768 = vunpack.c.l.bf16 %v765
      %v769 = vunpack.c.h.bf16 %v765
      %v770 = vmul.f32 %v766, 1.442695
      %v771 = vpow.pop %v770
      %v772 = vmul.f32 %v767, 1.442695
      %v773 = vpow.pop %v772
      %v774 = vmul.f32 %v768, 1.442695
      %v775 = vpow.pop %v774
      %v776 = vmul.f32 %v769, 1.442695
      %v777 = vpow.pop %v776
      %v778 = vpack.c.bf16 %v773, %v771
      %v779 = vpack.c.bf16 %v777, %v775
      %v780 = vunpack.c.l.bf16 %v778
      %v781 = vunpack.c.h.bf16 %v778
      %v782 = vunpack.c.l.bf16 %v779
      %v783 = vunpack.c.h.bf16 %v779
      %784 = vadd.xlane.f32.xlu0 %v780
      %v785 = vpop.xlane.xlu0 %784
      %786 = vadd.xlane.f32.xlu0 %v781
      %v787 = vpop.xlane.xlu0 %786
      %788 = vadd.xlane.f32.xlu0 %v782
      %v789 = vpop.xlane.xlu0 %788
      %790 = vadd.xlane.f32.xlu0 %v783
      %v791 = vpop.xlane.xlu0 %790
      %v792 = vadd.f32 %v785, 1e-16
      %v793 = vadd.f32 %v787, 1e-16
      %v794 = vadd.f32 %v789, 1e-16
      %v795 = vadd.f32 %v791, 1e-16
      %s796 = scalar_lea.vmem %s3, 256
      %v797 = vld [vmem:[%s796] sm:$0xff]
      %v798 = vld [vmem:[%s796 + $0x8] sm:$0xff]
      %v799 = vld [vmem:[%s796 + $0x10] sm:$0xff]
      %v800 = vld [vmem:[%s796 + $0x18] sm:$0xff]
      %v801 = vld [vmem:[%s796 + $0x20] sm:$0xff]
      %v802 = vld [vmem:[%s796 + $0x28] sm:$0xff]
      %v803 = vld [vmem:[%s796 + $0x30] sm:$0xff]
      %v804 = vld [vmem:[%s796 + $0x38] sm:$0xff]
      %v805 = vld [vmem:[%s796 + $0x40] sm:$0xff]
      %v806 = vld [vmem:[%s796 + $0x48] sm:$0xff]
      %v807 = vld [vmem:[%s796 + $0x50] sm:$0xff]
      %v808 = vld [vmem:[%s796 + $0x58] sm:$0xff]
      %v809 = vld [vmem:[%s796 + $0x60] sm:$0xff]
      %v810 = vld [vmem:[%s796 + $0x68] sm:$0xff]
      %v811 = vld [vmem:[%s796 + $0x70] sm:$0xff]
      %v812 = vld [vmem:[%s796 + $0x78] sm:$0xff]
      %v813 = vpack.c.bf16 %v798, %v797
      %v814 = vpack.c.bf16 %v800, %v799
      %v815 = vpack.c.bf16 %v802, %v801
      %v816 = vpack.c.bf16 %v804, %v803
      %v817 = vpack.c.bf16 %v806, %v805
      %v818 = vpack.c.bf16 %v808, %v807
      %v819 = vpack.c.bf16 %v810, %v809
      %v820 = vpack.c.bf16 %v812, %v811
      %821 = vmatpush.bf16.msra.mxu0 %v820
      %822 = vmatpush.bf16.msra.mxu0 %v819
      %823 = vmatpush.bf16.msra.mxu0 %v818
      %824 = vmatpush.bf16.msra.mxu0 %v817
      %825 = vmatpush.bf16.msra.mxu0 %v816
      %826 = vmatpush.bf16.msra.mxu0 %v815
      %827 = vmatpush.bf16.msra.mxu0 %v814
      %828 = vmatpush.bf16.msra.mxu0 %v813
      %829 = vmatmul.bf16.gmra.mxu0 %v778
      %v830 = vpop.f32.mrf.mxu0
      %v831 = vadd.f32 0.0, %v830
      %v832 = vpop.f32.mrf.mxu0
      %v833 = vadd.f32 0.0, %v832
      %834 = vmatmul.bf16.gmra.mxu0 %v779
      %v835 = vpop.f32.mrf.mxu0
      %v836 = vadd.f32 0.0, %v835
      %v837 = vpop.f32.mrf.mxu0
      %v838 = vadd.f32 0.0, %v837
      %839 = vdwg.mxu0
      %v840 = vrcp.pop %v792
      %v841 = vrcp.pop %v793
      %v842 = vrcp.pop %v794
      %v843 = vrcp.pop %v795
      %v844 = vmul.f32 %v831, %v840
      %v845 = vmul.f32 %v833, %v841
      %v846 = vmul.f32 %v836, %v842
      %v847 = vmul.f32 %v838, %v843
      %848 = vset.pattern.permute.xlu0 3
      %849 = vperm.xlu0 %848, %v259
      %v850 = vpop.permute.xlu0 %849
      %v853 = vunpack.c.l.s4 839922192
      %v854 = vunpack.c.0.s8 %v853
      %v855 = vperm.slane %v850, %v854
      %856 = vset.pattern.permute.xlu0 3
      %857 = vperm.xlu0 %856, %v260
      %v858 = vpop.permute.xlu0 %857
      %v861 = vunpack.c.l.s4 839922192
      %v862 = vunpack.c.0.s8 %v861
      %v863 = vperm.slane %v858, %v862
      %864 = vset.pattern.permute.xlu0 3
      %865 = vperm.xlu0 %864, %v261
      %v866 = vpop.permute.xlu0 %865
      %v869 = vunpack.c.l.s4 839922192
      %v870 = vunpack.c.0.s8 %v869
      %v871 = vperm.slane %v866, %v870
      %872 = vset.pattern.permute.xlu0 3
      %873 = vperm.xlu0 %872, %v262
      %v874 = vpop.permute.xlu0 %873
      %v877 = vunpack.c.l.s4 839922192
      %v878 = vunpack.c.0.s8 %v877
      %v879 = vperm.slane %v874, %v878
      %v880 = vperm.slane %v498, 1
      %v881 = vunpack.c.l.bf16 %v855
      %v882 = vunpack.c.l.bf16 %v863
      %v883 = vunpack.c.l.bf16 %v871
      %v884 = vunpack.c.l.bf16 %v879
      %v885 = vunpack.c.l.bf16 %v880
      %v886 = vadd.f32 %v881, %v885
      %v887 = vadd.f32 %v882, %v885
      %v888 = vadd.f32 %v883, %v885
      %v889 = vadd.f32 %v884, %v885
      %v890 = vpack.c.bf16 %v886, %v886
      %v891 = vpack.c.bf16 %v887, %v887
      %v892 = vpack.c.bf16 %v888, %v888
      %v893 = vpack.c.bf16 %v889, %v889
      %v894 = vunpack.c.l.bf16 %v890
      %v895 = vunpack.c.l.bf16 %v891
      %v896 = vunpack.c.l.bf16 %v892
      %v897 = vunpack.c.l.bf16 %v893
      %v898 = vmul.f32 %v894, 0.20019531
      %v899 = vmul.f32 %v895, 0.20019531
      %v900 = vmul.f32 %v896, 0.20019531
      %v901 = vmul.f32 %v897, 0.20019531
      %v902 = vpack.c.bf16 %v898, %v898
      %v903 = vpack.c.bf16 %v899, %v899
      %v904 = vpack.c.bf16 %v900, %v900
      %v905 = vpack.c.bf16 %v901, %v901
      %v906 = vunpack.c.l.bf16 %v902
      %v907 = vunpack.c.l.bf16 %v903
      %v908 = vunpack.c.l.bf16 %v904
      %v909 = vunpack.c.l.bf16 %v905
      %v910 = vmax.f32 %v894, %v906
      %v911 = vmax.f32 %v895, %v907
      %v912 = vmax.f32 %v896, %v908
      %v913 = vmax.f32 %v897, %v909
      %v914 = vpack.c.bf16 %v910, %v910
      %v915 = vpack.c.bf16 %v911, %v911
      %v916 = vpack.c.bf16 %v912, %v912
      %v917 = vpack.c.bf16 %v913, %v913
      %v918 = vunpack.c.l.bf16 %v914
      %v919 = vunpack.c.l.bf16 %v915
      %v920 = vunpack.c.l.bf16 %v916
      %v921 = vunpack.c.l.bf16 %v917
      %v922 = vadd.f32 %v918, %v346
      %v923 = vadd.f32 %v919, %v347
      %v924 = vadd.f32 %v920, %v348
      %v925 = vadd.f32 %v921, %v349
      %v926 = vpack.c.bf16 %v922, %v922
      %v927 = vpack.c.bf16 %v923, %v923
      %v928 = vpack.c.bf16 %v924, %v924
      %v929 = vpack.c.bf16 %v925, %v925
      %v930 = vunpack.c.l.bf16 %v926
      %v931 = vunpack.c.l.bf16 %v927
      %v932 = vunpack.c.l.bf16 %v928
      %v933 = vunpack.c.l.bf16 %v929
      %934 = vmax.xlane.f32.xlu0 %v930
      %v935 = vpop.xlane.xlu0 %934
      %936 = vmax.xlane.f32.xlu0 %v931
      %v937 = vpop.xlane.xlu0 %936
      %938 = vmax.xlane.f32.xlu0 %v932
      %v939 = vpop.xlane.xlu0 %938
      %940 = vmax.xlane.f32.xlu0 %v933
      %v941 = vpop.xlane.xlu0 %940
      %v942 = vpack.c.bf16 %v935, %v935
      %v943 = vpack.c.bf16 %v937, %v937
      %v944 = vpack.c.bf16 %v939, %v939
      %v945 = vpack.c.bf16 %v941, %v941
      %v946 = vunpack.c.l.bf16 %v942
      %v947 = vunpack.c.l.bf16 %v943
      %v948 = vunpack.c.l.bf16 %v944
      %v949 = vunpack.c.l.bf16 %v945
      %v950 = vsub.f32 %v930, %v946
      %v951 = vsub.f32 %v931, %v947
      %v952 = vsub.f32 %v932, %v948
      %v953 = vsub.f32 %v933, %v949
      %v954 = vpack.c.bf16 %v951, %v950
      %v955 = vpack.c.bf16 %v953, %v952
      %v956 = vunpack.c.l.bf16 %v954
      %v957 = vunpack.c.h.bf16 %v954
      %v958 = vunpack.c.l.bf16 %v955
      %v959 = vunpack.c.h.bf16 %v955
      %v960 = vmul.f32 %v956, 1.442695
      %v961 = vpow.pop %v960
      %v962 = vmul.f32 %v957, 1.442695
      %v963 = vpow.pop %v962
      %v964 = vmul.f32 %v958, 1.442695
      %v965 = vpow.pop %v964
      %v966 = vmul.f32 %v959, 1.442695
      %v967 = vpow.pop %v966
      %v968 = vpack.c.bf16 %v963, %v961
      %v969 = vpack.c.bf16 %v967, %v965
      %v970 = vunpack.c.l.bf16 %v968
      %v971 = vunpack.c.h.bf16 %v968
      %v972 = vunpack.c.l.bf16 %v969
      %v973 = vunpack.c.h.bf16 %v969
      %974 = vadd.xlane.f32.xlu0 %v970
      %v975 = vpop.xlane.xlu0 %974
      %976 = vadd.xlane.f32.xlu0 %v971
      %v977 = vpop.xlane.xlu0 %976
      %978 = vadd.xlane.f32.xlu0 %v972
      %v979 = vpop.xlane.xlu0 %978
      %980 = vadd.xlane.f32.xlu0 %v973
      %v981 = vpop.xlane.xlu0 %980
      %v982 = vadd.f32 %v975, 1e-16
      %v983 = vadd.f32 %v977, 1e-16
      %v984 = vadd.f32 %v979, 1e-16
      %v985 = vadd.f32 %v981, 1e-16
      %s986 = scalar_lea.vmem %s3, 384
      %v987 = vld [vmem:[%s986] sm:$0xff]
      %v988 = vld [vmem:[%s986 + $0x8] sm:$0xff]
      %v989 = vld [vmem:[%s986 + $0x10] sm:$0xff]
      %v990 = vld [vmem:[%s986 + $0x18] sm:$0xff]
      %v991 = vld [vmem:[%s986 + $0x20] sm:$0xff]
      %v992 = vld [vmem:[%s986 + $0x28] sm:$0xff]
      %v993 = vld [vmem:[%s986 + $0x30] sm:$0xff]
      %v994 = vld [vmem:[%s986 + $0x38] sm:$0xff]
      %v995 = vld [vmem:[%s986 + $0x40] sm:$0xff]
      %v996 = vld [vmem:[%s986 + $0x48] sm:$0xff]
      %v997 = vld [vmem:[%s986 + $0x50] sm:$0xff]
      %v998 = vld [vmem:[%s986 + $0x58] sm:$0xff]
      %v999 = vld [vmem:[%s986 + $0x60] sm:$0xff]
      %v1000 = vld [vmem:[%s986 + $0x68] sm:$0xff]
      %v1001 = vld [vmem:[%s986 + $0x70] sm:$0xff]
      %v1002 = vld [vmem:[%s986 + $0x78] sm:$0xff]
      %v1003 = vpack.c.bf16 %v988, %v987
      %v1004 = vpack.c.bf16 %v990, %v989
      %v1005 = vpack.c.bf16 %v992, %v991
      %v1006 = vpack.c.bf16 %v994, %v993
      %v1007 = vpack.c.bf16 %v996, %v995
      %v1008 = vpack.c.bf16 %v998, %v997
      %v1009 = vpack.c.bf16 %v1000, %v999
      %v1010 = vpack.c.bf16 %v1002, %v1001
      %1011 = vmatpush.bf16.msra.mxu0 %v1010
      %1012 = vmatpush.bf16.msra.mxu0 %v1009
      %1013 = vmatpush.bf16.msra.mxu0 %v1008
      %1014 = vmatpush.bf16.msra.mxu0 %v1007
      %1015 = vmatpush.bf16.msra.mxu0 %v1006
      %1016 = vmatpush.bf16.msra.mxu0 %v1005
      %1017 = vmatpush.bf16.msra.mxu0 %v1004
      %1018 = vmatpush.bf16.msra.mxu0 %v1003
      %1019 = vmatmul.bf16.gmra.mxu0 %v968
      %v1020 = vpop.f32.mrf.mxu0
      %v1021 = vadd.f32 0.0, %v1020
      %v1022 = vpop.f32.mrf.mxu0
      %v1023 = vadd.f32 0.0, %v1022
      %1024 = vmatmul.bf16.gmra.mxu0 %v969
      %v1025 = vpop.f32.mrf.mxu0
      %v1026 = vadd.f32 0.0, %v1025
      %v1027 = vpop.f32.mrf.mxu0
      %v1028 = vadd.f32 0.0, %v1027
      %1029 = vdwg.mxu0
      %v1030 = vrcp.pop %v982
      %v1031 = vrcp.pop %v983
      %v1032 = vrcp.pop %v984
      %v1033 = vrcp.pop %v985
      %v1034 = vmul.f32 %v1021, %v1030
      %v1035 = vmul.f32 %v1023, %v1031
      %v1036 = vmul.f32 %v1026, %v1032
      %v1037 = vmul.f32 %v1028, %v1033
      %1042 = vrot.lane.b32.xlu0 %v654, 8
      %v1043 = vpop.permute.xlu0 %1042
      %1044 = vrot.lane.b32.xlu0 %v655, 8
      %v1045 = vpop.permute.xlu0 %1044
      %1046 = vrot.lane.b32.xlu0 %v656, 8
      %v1047 = vpop.permute.xlu0 %1046
      %1048 = vrot.lane.b32.xlu0 %v657, 8
      %v1049 = vpop.permute.xlu0 %1048
      %1058 = vrot.lane.b32.xlu0 %v844, 16
      %v1059 = vpop.permute.xlu0 %1058
      %1060 = vrot.lane.b32.xlu0 %v845, 16
      %v1061 = vpop.permute.xlu0 %1060
      %1062 = vrot.lane.b32.xlu0 %v846, 16
      %v1063 = vpop.permute.xlu0 %1062
      %1064 = vrot.lane.b32.xlu0 %v847, 16
      %v1065 = vpop.permute.xlu0 %1064
      %1074 = vrot.lane.b32.xlu0 %v1034, 24
      %v1075 = vpop.permute.xlu0 %1074
      %1076 = vrot.lane.b32.xlu0 %v1035, 24
      %v1077 = vpop.permute.xlu0 %1076
      %1078 = vrot.lane.b32.xlu0 %v1036, 24
      %v1079 = vpop.permute.xlu0 %1078
      %1080 = vrot.lane.b32.xlu0 %v1037, 24
      %v1081 = vpop.permute.xlu0 %1080
      %vm1086 = vcmask 64512
      %v1087 = vsel %vm1086, %v461, %v1043
      %v1088 = vsel %vm1086, %v462, %v1045
      %v1089 = vsel %vm1086, %v463, %v1047
      %v1090 = vsel %vm1086, %v464, %v1049
      %vm1091 = vcmask 130048
      %v1092 = vsel %vm1091, %v1087, %v1059
      %v1093 = vsel %vm1091, %v1088, %v1061
      %v1094 = vsel %vm1091, %v1089, %v1063
      %v1095 = vsel %vm1091, %v1090, %v1065
      %vm1096 = vcmask 195584
      %v1097 = vsel %vm1096, %v1092, %v1075
      %v1098 = vsel %vm1096, %v1093, %v1077
      %v1099 = vsel %vm1096, %v1094, %v1079
      %v1100 = vsel %vm1096, %v1095, %v1081
      %vm1101 = vcmask 261120
      %1102 = vst.msk [vmem:[%s216] sm:$0xff] %vm1101, %v1097
      %1103 = vst.msk [vmem:[%s216 + $0x8] sm:$0xff] %vm1101, %v1098
      %1104 = vst.msk [vmem:[%s216 + $0x10] sm:$0xff] %vm1101, %v1099
      %1105 = vst.msk [vmem:[%s216 + $0x18] sm:$0xff] %vm1101, %v1100
      %s1106 = smul.u32 4, %s15
      %p1107 = scmp.lt.s32.totalorder %s1106, 15
      %s1108 = scalar_select %p1107, %s1106, 15
      %s1109 = smul.addr %s1108, 8
      %s1110 = scalar_lea.vmem %s4, %s1109
      // Predicated region
      $region37: #{tpu_custom_call.1} parent=35 // pred_check
        %p1111 = pneg %p127
      $region38: #{tpu_custom_call.1} parent=35 // pred_check_branch
        %1113 = sbr.rel (%p1111) target = $region40
      $region39: #{tpu_custom_call.1} parent=35 // pred_region
        %s1114 = smul.u32 4, %s15
      $region40: #{tpu_custom_call.1} parent=35 // pred_fallthru
        _
    $region36: #{tpu_custom_call.1} parent=5 // pred_fallthru
      _
    %p1115 = scmp.le.s32.totalorder 2, %s10
    // Predicated region
    $region41: #{tpu_custom_call.1} parent=5 // pred_check
      %p1116 = pneg %p1115
    $region42: #{tpu_custom_call.1} parent=5 // pred_check_branch
      %1118 = sbr.rel (%p1116) target = $region44
    $region43: #{tpu_custom_call.1} parent=5 // pred_region
      %s1119 = ssub.s32 %s10, 2
      // Predicated region
      $region45: #{tpu_custom_call.1} parent=43 // pred_check
        %p1120 = pneg %p133
      $region46: #{tpu_custom_call.1} parent=43 // pred_check_branch
        %1122 = sbr.rel (%p1120) target = $region48
      $region47: #{tpu_custom_call.1} parent=43 // pred_region
        %s1123 = smul.u32 4, %s16
        %p1124 = scmp.lt.s32.totalorder %s1123, 15
        %s1125 = scalar_select %p1124, %s1123, 15
        %s1126 = smul.addr %s1125, 8
        %s1127 = scalar_lea.vmem %s4, %s1126
      $region48: #{tpu_custom_call.1} parent=43 // pred_fallthru
        _
    $region44: #{tpu_custom_call.1} parent=5 // pred_fallthru
      _
  $region6: #{tpu_custom_call.1} parent=0 // loop_footer
    %s14 = sadd.s32 1, %s10
  $region7: #{tpu_custom_call.1} parent=0 // loop_footer_branch
    %9 = sbr.rel target = $region3
  $region8: #{tpu_custom_call.1} parent=0 // loop_exit
    _

</llo_original>
